<compile_context>
chip_gen: v6e
topology: v6e:2x2x1
jax: 0.10.0
libtpu: 0.0.40
codegen_flags: <defaults>
</compile_context>

<pallas_src>
import jax
import jax.numpy as jnp
from jax.experimental import pallas as pl
from jax.experimental.pallas import tpu as pltpu


def _residual_add_kernel(x_ref, o_ref):
    # out = residual + blocks(x) == x + x   (both Identity)
    x = x_ref[...]
    o_ref[...] = x + x


def _round_up(n, m):
    return ((n + m - 1) // m) * m


def residual_block_forward(x, in_channels=None, out_channels=None, activation="elu",
                           *, min_pallas_bytes=1 << 20):
    """Pallas implementation of ResidualBlock.forward.

    `in_channels`, `out_channels`, `activation` are accepted for API parity.
    Since both `blocks` and `shortcut` are nn.Identity and the activation is never
    invoked in forward(), the result is x + x regardless of the shortcut condition.
    """
    orig_shape = x.shape
    dtype = x.dtype
    total = x.size
    itemsize = jnp.dtype(dtype).itemsize
    total_bytes = total * itemsize

    # Early exit: for tiny tensors the pallas_call launch/DMA-setup cost dominates and
    # a fused XLA elementwise add is already at roofline.
    if total == 0 or total_bytes < min_pallas_bytes:
        return x + x

    # Lane-dense last dim: largest of 512/256/128 dividing the flat size, so the 2D
    # view is a free (metadata-only) reshape and every store is a full-width vst.
    LANE = next((l for l in (512, 256, 128) if total % l == 0), None)
    if LANE is None:
        # Total not a multiple of 128: a plain XLA add is already HBM-roofline for this
        # memory-bound op and avoids the pad/slice extra HBM passes a kernel would need.
        return x + x

    rows = total // LANE
    # Sublane multiple: 8 for 4-byte, 16 for 2-byte, 32 for 1-byte dtypes.
    sub_mult = {4: 8, 2: 16, 1: 32}.get(itemsize, 8)

    # ~4 MiB blocks; pipelined footprint = block * (in + out) * 2 buffers = 16 MiB.
    target_block_bytes = 4 * 1024 * 1024
    max_block_rows = max(
        sub_mult, (target_block_bytes // (LANE * itemsize)) // sub_mult * sub_mult
    )

    if rows <= sub_mult:
        # Single full-extent block (legal even when rows is not a multiple of 8,
        # because the block dim equals the full array dim).
        block_rows = rows
    else:
        block_rows = min(max_block_rows, (rows // sub_mult) * sub_mult)
        # Guarantee >= 2 grid steps so the "parallel" axis can actually shard across
        # both TensorCores on v7x. Costs one ~0.35us step on single-TC chips.
        if pl.cdiv(rows, block_rows) < 2:
            block_rows = min(block_rows, _round_up(pl.cdiv(rows, 2), sub_mult))

    grid = pl.cdiv(rows, block_rows)
    x2d = x.reshape(rows, LANE)  # metadata-only reshape of the contiguous input

    out2d = pl.pallas_call(
        _residual_add_kernel,
        out_shape=jax.ShapeDtypeStruct((rows, LANE), dtype),
        grid=(grid,),
        in_specs=[pl.BlockSpec((block_rows, LANE), lambda i: (i, 0))],
        out_specs=pl.BlockSpec((block_rows, LANE), lambda i: (i, 0)),
        compiler_params=pltpu.CompilerParams(
            dimension_semantics=("parallel",),
            vmem_limit_bytes=32 << 20,
        ),
        cost_estimate=pl.CostEstimate(
            flops=total, transcendentals=0, bytes_accessed=2 * total_bytes
        ),
    )(x2d)

    # Metadata-only reshape back to the caller's NCHW layout (no extra HBM pass).
    return out2d.reshape(orig_shape)


if __name__ == "__main__":
    key = jax.random.PRNGKey(0)

    # ResidualBlock(in_channels=4, out_channels=4, activation='elu') on the spec's small
    # shape. min_pallas_bytes=0 forces the Pallas path so the kernel itself is exercised.
    N, C, H, W = 2, 4, 16, 16
    x = jax.random.normal(key, (N, C, H, W), dtype=jnp.float32)
    out = residual_block_forward(x, in_channels=C, out_channels=C, activation="elu",
                                 min_pallas_bytes=0)
    out = jax.block_until_ready(out)
    assert out.shape == x.shape and out.dtype == x.dtype
    assert jnp.array_equal(out, x + x)

    # Multi-step grid with a non-divisible (masked) edge block, default tiny-input
    # threshold (4 MB tensor -> kernel path, grid forced to >= 2 steps).
    x2 = jax.random.normal(jax.random.PRNGKey(1), (4, 4, 256, 255), dtype=jnp.float32)
    out2 = jax.block_until_ready(
        residual_block_forward(x2, in_channels=4, out_channels=4, activation="elu")
    )
    assert jnp.array_equal(out2, x2 + x2)

    # Ragged total (not a multiple of 128) -> XLA fallback path, still correct.
    x3 = jax.random.normal(jax.random.PRNGKey(2), (2, 3, 5, 7), dtype=jnp.float32)
    out3 = jax.block_until_ready(
        residual_block_forward(x3, in_channels=3, out_channels=3, activation="elu")
    )
    assert jnp.array_equal(out3, x3 + x3)

    print("KERNEL_OK")
</pallas_src>

<mosaic_0001>
module attributes {stable_mosaic.version = 11 : i64} {
  func.func @_residual_add_kernel(%arg0: i32, %arg1: memref<4x512xf32, #tpu.memory_space<vmem>>, %arg2: memref<4x512xf32, #tpu.memory_space<vmem>>) attributes {dimension_semantics = [#tpu.dimension_semantics<parallel>], iteration_bounds = array<i64: 1>, scalar_prefetch = 0 : i64, scratch_operands = 0 : i64, tpu.core_type = #tpu.core_type<tc>, window_params = [{transform_indices = @transform_0, window_bounds = array<i64: 4, 512>}, {transform_indices = @transform_1, window_bounds = array<i64: 4, 512>}]} {
    %c0 = arith.constant 0 : index
    %c0_0 = arith.constant 0 : index
    %0 = vector.load %arg1[%c0, %c0_0] : memref<4x512xf32, #tpu.memory_space<vmem>>, vector<4x512xf32>
    %1 = arith.addf %0, %0 : vector<4x512xf32>
    %c0_1 = arith.constant 0 : index
    %c0_2 = arith.constant 0 : index
    %2 = vector.load %arg2[%c0_1, %c0_2] : memref<4x512xf32, #tpu.memory_space<vmem>>, vector<4x512xf32>
    tpu.vector_store %arg2[%c0_1, %c0_2], %1 {strides = array<i32>} : memref<4x512xf32, #tpu.memory_space<vmem>>, vector<4x512xf32>,
    return
  }
  func.func @transform_0(%arg0: i32) -> (i32, i32) {
    %c0_i32 = arith.constant 0 : i32
    %c0_i32_0 = arith.constant 0 : i32
    return %arg0, %c0_i32 : i32, i32
  }
  func.func @transform_1(%arg0: i32) -> (i32, i32) {
    %c0_i32 = arith.constant 0 : i32
    %c0_i32_0 = arith.constant 0 : i32
    return %arg0, %c0_i32 : i32, i32
  }
}

</mosaic_0001>

<llo_original>
// kernel: tpu_custom_call.1
$region0: #{tpu_custom_call.1}
  #allocation0 [shape = 'u32[]', space=smem, size = 0x4, offset = 0x4, fixed_abs, tag = 'smem constant byte address 0x4 - core index']
  #allocation1 [shape = 'u32[144,128]{1,0:T(1,128)}', space=vmem, size = 0x12000, scoped, tag = 'internal scratch']
  %s0 = inlined_call_operand.hbm [shape: f32[4,512], index: 0, kind: input, shape index: {}]
  %s1 = inlined_call_operand.hbm [shape: f32[4,512], index: 1, kind: output, shape index: {}]
  %s2 = sld [smem:[#allocation0]]
  $region18: #{tpu_custom_call.1} parent=0
    _
  %s4 = ssub.s32 1, %s2
  %s5 = scalar_select 0, %s4, %s2
  $region1: #{tpu_custom_call.1} parent=0
    #allocation2 [shape = 'u8[8192]{0}', space=vmem, size = 0x2000, scoped, tag = 'input window, operand 0, single buffered']
    #allocation3 [shape = 's32[1]{0}', space=sflag, size = 0x4, scoped, tag = 'scoped memory for tpu_custom_call.1']
    #allocation4 [shape = 's32[1]{0}', space=sflag, size = 0x4, scoped, tag = 'scoped memory for tpu_custom_call.1']
    #allocation5 [shape = 'u8[8192]{0}', space=vmem, size = 0x2000, scoped, tag = 'output window, operand 0, single buffered']
    %6 = vsyncpa [#allocation3], 0
    %7 = vsyncpa [#allocation4], 0
    // Predicated region
    $region2: #{tpu_custom_call.1} parent=1 // pred_check
      _
    $region3: #{tpu_custom_call.1} parent=1 // pred_check_branch
      %9 = sbr.rel (0) target = $region5
    $region4: #{tpu_custom_call.1} parent=1 // pred_region
      %s11 = ssub.s32 256, 256
      %12 = vsyncadd [#allocation3], %s11
      %s14 = sshll.u32 [#allocation2], 4
      %s15 = int_to_ptr.vmem [resolvable:$true] %s14
      %17 = dma.hbm_to_vmem [thread:$0]  %s0, 256, %s15, [#allocation3]
    $region5: #{tpu_custom_call.1} parent=1 // pred_fallthru
      _
    // Predicated region
    $region6: #{tpu_custom_call.1} parent=1 // pred_check
      _
    $region7: #{tpu_custom_call.1} parent=1 // pred_check_branch
      %19 = sbr.rel (0) target = $region9
    $region8: #{tpu_custom_call.1} parent=1 // pred_region
      %20 = dma.done [#allocation3], 256
    $region9: #{tpu_custom_call.1} parent=1 // pred_fallthru
      _
    %v21 = vld [vmem:[#allocation2] sm:$0xff]
    %v22 = vld [vmem:[#allocation2 + $0x8] sm:$0xff]
    %v23 = vadd.f32 %v21, %v21
    %v24 = vadd.f32 %v22, %v22
    %25 = vst [vmem:[#allocation5] sm:$0xff] %v23
    %26 = vst [vmem:[#allocation5 + $0x8] sm:$0xff] %v24
    // Predicated region
    $region10: #{tpu_custom_call.1} parent=1 // pred_check
      _
    $region11: #{tpu_custom_call.1} parent=1 // pred_check_branch
      %28 = sbr.rel (0) target = $region13
    $region12: #{tpu_custom_call.1} parent=1 // pred_region
      %s30 = ssub.s32 256, 256
      %31 = vsyncadd [#allocation4], %s30
      %s33 = sshll.u32 [#allocation5], 4
      %s34 = int_to_ptr.vmem [resolvable:$true] %s33
      %36 = dma.vmem_to_hbm [thread:$0]  %s34, 256, %s1, [#allocation4]
    $region13: #{tpu_custom_call.1} parent=1 // pred_fallthru
      _
    // Predicated region
    $region14: #{tpu_custom_call.1} parent=1 // pred_check
      _
    $region15: #{tpu_custom_call.1} parent=1 // pred_check_branch
      %38 = sbr.rel (0) target = $region17
    $region16: #{tpu_custom_call.1} parent=1 // pred_region
      %39 = dma.done [#allocation4], 256
    $region17: #{tpu_custom_call.1} parent=1 // pred_fallthru
      _
    %40 = vsyncpa [#allocation3], 1
    %41 = vsyncpa [#allocation4], 1

</llo_original>
